<compile_context>
chip_gen: v7x
topology: tpu7x:2x2x1
jax: 0.10.0
libtpu: 0.0.40
codegen_flags: <defaults>
</compile_context>

<pallas_src>
import jax
import jax.numpy as jnp
from jax.experimental import pallas as pl
from jax.experimental.pallas import tpu as pltpu

NUM_LAYERS = 2


def charmodel_kernel(tok_ref, state_in_ref, emb_gates_ref, whh0_ref, wxh_ref,
                     b_ref, wdec_ref, bdec_ref, logits_ref, state_out_ref):
    """Runs T LSTM timesteps (2 layers) + decoder in a single invocation.

    tok_ref:       (T, B) int32  SMEM (scalar prefetch) token ids
    state_in_ref:  (B, 2*L*H)    packed [h_l0 | c_l0 | h_l1 | c_l1]
    emb_gates_ref: (V, 4H)       embedding folded into layer-0 input weights
    whh0_ref:      (H, 4H)       layer-0 hidden->gates (lane-packed i|f|g|o)
    wxh_ref:       (L-1, 2H, 4H) layers>=1 stacked [W_ih; W_hh] (lane-packed)
    b_ref:         (L, 1, 4H)    combined bias (b_ih + b_hh), lane-packed
    wdec_ref:      (H, O)        decoder weight (pre-transposed)
    bdec_ref:      (1, O)        decoder bias
    logits_ref:    (B, T*O)      lane-dense logits slab (written once)
    state_out_ref: (B, 2*L*H)    packed final state (written once)
    """
    T, B = tok_ref.shape
    H = whh0_ref.shape[0]
    L = NUM_LAYERS

    # --- unpack resident state slab (lane slices, once per call) ---
    slab = state_in_ref[...]                                    # (B, 2*L*H)
    h = [slab[:, (2 * l + 0) * H:(2 * l + 1) * H] for l in range(L)]
    c = [slab[:, (2 * l + 1) * H:(2 * l + 2) * H] for l in range(L)]

    # --- hoist weight/bias loads out of the time loop ---
    whh0 = whh0_ref[...]                                        # (H, 4H)
    wxh = [wxh_ref[l] for l in range(L - 1)]                    # (2H, 4H) each
    bias = [b_ref[l] for l in range(L)]                         # (1, 4H) each
    wdec = wdec_ref[...]                                        # (H, O)
    bdec = bdec_ref[...]                                        # (1, O)

    def lstm_gates(z, c_prev):
        # PyTorch gate order i, f, g, o packed along the 4H lanes.
        i_g = jax.nn.sigmoid(z[:, 0 * H:1 * H])
        f_g = jax.nn.sigmoid(z[:, 1 * H:2 * H])
        g_g = jnp.tanh(z[:, 2 * H:3 * H])
        o_g = jax.nn.sigmoid(z[:, 3 * H:4 * H])
        c_new = f_g * c_prev + i_g * g_g
        h_new = o_g * jnp.tanh(c_new)
        return h_new, c_new

    logits_pieces = []
    for t in range(T):                 # static unroll: whole decode in one call
        # layer 0: embedding folded into the (V, 4H) gate table -> B dynamic
        # row reads keyed by SMEM token scalars (no embedding matmul at all).
        rows = [emb_gates_ref[pl.ds(tok_ref[t, b], 1), :] for b in range(B)]
        x_gates = jnp.concatenate(rows, axis=0)                 # (B, 4H)
        z0 = (x_gates
              + jnp.dot(h[0], whh0, preferred_element_type=jnp.float32)
              + bias[0])
        h[0], c[0] = lstm_gates(z0, c[0])
        x = h[0]

        # layers 1..L-1: single stacked [x | h] @ (2H, 4H) matmul per layer.
        for l in range(1, L):
            xh = jnp.concatenate([x, h[l]], axis=1)             # (B, 2H)
            zl = (jnp.dot(xh, wxh[l - 1], preferred_element_type=jnp.float32)
                  + bias[l])
            h[l], c[l] = lstm_gates(zl, c[l])
            x = h[l]

        # decoder on the final layer's hidden (dropout=0 between layers)
        logits_pieces.append(
            jnp.dot(x, wdec, preferred_element_type=jnp.float32) + bdec)

    # --- single lane-dense stores, written exactly once per call ---
    logits_ref[...] = jnp.concatenate(logits_pieces, axis=1)    # (B, T*O)
    state_out_ref[...] = jnp.concatenate(
        [p for l in range(L) for p in (h[l], c[l])], axis=1)    # (B, 2*L*H)


# ------------------------- host-side plumbing -------------------------------

def pack_state(h, c):
    """(L,B,H),(L,B,H) -> (B, 2*L*H) slab [h_l0 | c_l0 | h_l1 | c_l1]."""
    L = h.shape[0]
    pieces = []
    for layer in range(L):
        pieces += [h[layer], c[layer]]
    return jnp.concatenate(pieces, axis=1)


def unpack_state(slab, num_layers, hidden_size):
    H = hidden_size
    hs = [slab[:, (2 * l + 0) * H:(2 * l + 1) * H] for l in range(num_layers)]
    cs = [slab[:, (2 * l + 1) * H:(2 * l + 2) * H] for l in range(num_layers)]
    return jnp.stack(hs), jnp.stack(cs)


def _charmodel_pallas(tokens_tb, state_slab, params):
    """tokens_tb: (T, B) int32; state_slab: (B, 2*L*H) f32."""
    T, B = tokens_tb.shape
    V, G = params["emb_gates"].shape           # G == 4H
    H = G // 4
    O = params["w_dec"].shape[1]
    L = NUM_LAYERS
    S = 2 * L * H

    grid_spec = pltpu.PrefetchScalarGridSpec(
        num_scalar_prefetch=1,                  # tokens -> SMEM
        grid=(1,),                              # whole sequence in one step
        in_specs=[
            pl.BlockSpec((B, S), lambda i, tok: (0, 0)),           # state slab
            pl.BlockSpec((V, G), lambda i, tok: (0, 0)),           # emb_gates
            pl.BlockSpec((H, G), lambda i, tok: (0, 0)),           # w_hh layer0
            pl.BlockSpec((L - 1, 2 * H, G), lambda i, tok: (0, 0, 0)),  # w_xh l>=1
            pl.BlockSpec((L, 1, G), lambda i, tok: (0, 0, 0)),     # bias
            pl.BlockSpec((H, O), lambda i, tok: (0, 0)),           # w_dec
            pl.BlockSpec((1, O), lambda i, tok: (0, 0)),           # b_dec
        ],
        out_specs=(
            pl.BlockSpec((B, T * O), lambda i, tok: (0, 0)),       # logits slab
            pl.BlockSpec((B, S), lambda i, tok: (0, 0)),           # final state
        ),
    )

    logits_slab, state_out = pl.pallas_call(
        charmodel_kernel,
        out_shape=(
            jax.ShapeDtypeStruct((B, T * O), jnp.float32),
            jax.ShapeDtypeStruct((B, S), jnp.float32),
        ),
        grid_spec=grid_spec,
        compiler_params=pltpu.CompilerParams(
            dimension_semantics=("arbitrary",)),
    )(tokens_tb.astype(jnp.int32), state_slab,
      params["emb_gates"], params["w_hh0"], params["w_xh"], params["b"],
      params["w_dec"], params["b_dec"])

    logits_t = logits_slab.reshape(B, T, O).transpose(1, 0, 2)   # (T, B, O)
    return logits_t, state_out


def char_model_forward(tokens, hidden_state, params):
    """Matches CharModel.forward (type_of_model=0, unidirectional, seq_len=1)."""
    h0, c0 = hidden_state                        # each (L, B, H)
    L, B, H = h0.shape
    slab = pack_state(h0, c0)
    logits_t, state_out = _charmodel_pallas(tokens.reshape(1, B), slab, params)
    h_n, c_n = unpack_state(state_out, L, H)
    return logits_t[0], (h_n, c_n)


def char_model_decode(tokens_seq, hidden_state, params):
    """Fused multi-step decode: T LSTM steps in ONE pallas_call."""
    h0, c0 = hidden_state
    L, B, H = h0.shape
    slab = pack_state(h0, c0)
    logits_t, state_out = _charmodel_pallas(tokens_seq, slab, params)
    h_n, c_n = unpack_state(state_out, L, H)
    return logits_t, (h_n, c_n)


# ------------------------- params (PyTorch-layout raw + kernel packing) -----

def init_raw_params(key, vocab_size, hidden_size, output_size):
    """Raw weights in PyTorch layout (nn.Embedding / nn.LSTM / nn.Linear)."""
    H, O, L, V = hidden_size, output_size, NUM_LAYERS, vocab_size
    ks = jax.random.split(key, 7)
    scale = 0.1
    return {
        "embedding": scale * jax.random.normal(ks[0], (V, H), jnp.float32),
        "w_ih": scale * jax.random.normal(ks[1], (L, 4 * H, H), jnp.float32),
        "w_hh": scale * jax.random.normal(ks[2], (L, 4 * H, H), jnp.float32),
        "b_ih": scale * jax.random.normal(ks[3], (L, 4 * H), jnp.float32),
        "b_hh": scale * jax.random.normal(ks[4], (L, 4 * H), jnp.float32),
        "w_dec": scale * jax.random.normal(ks[5], (O, H), jnp.float32),
        "b_dec": scale * jax.random.normal(ks[6], (O,), jnp.float32),
    }


def pack_params(raw):
    """Derive the lane-packed, embedding-folded kernel parameters."""
    H = raw["embedding"].shape[1]
    L = NUM_LAYERS
    # layer 0: fold embedding into the input->gates weights: (V, 4H)
    emb_gates = raw["embedding"] @ raw["w_ih"][0].T
    # layer 0 hidden->gates, lane-packed: (H, 4H)
    w_hh0 = raw["w_hh"][0].T
    # layers >= 1: stacked [W_ih; W_hh] so concat([x, h]) @ w_xh does both: (2H, 4H)
    w_xh = jnp.stack([
        jnp.concatenate([raw["w_ih"][l].T, raw["w_hh"][l].T], axis=0)
        for l in range(1, L)])
    # combined bias per layer: (L, 1, 4H)
    b = (raw["b_ih"] + raw["b_hh"]).reshape(L, 1, 4 * H)
    return {
        "emb_gates": emb_gates,
        "w_hh0": w_hh0,
        "w_xh": w_xh,
        "b": b,
        "w_dec": raw["w_dec"].T,                 # (H, O)
        "b_dec": raw["b_dec"].reshape(1, -1),    # (1, O)
    }


# ------------------------- pure-JAX reference (PyTorch semantics) -----------

def reference_step(tokens, h, c, raw):
    H = raw["embedding"].shape[1]
    x = raw["embedding"][tokens]                                 # (B, H)
    h_out, c_out = [], []
    for l in range(NUM_LAYERS):
        z = (x @ raw["w_ih"][l].T + h[l] @ raw["w_hh"][l].T
             + raw["b_ih"][l] + raw["b_hh"][l])                  # (B, 4H)
        i = jax.nn.sigmoid(z[:, 0 * H:1 * H])
        f = jax.nn.sigmoid(z[:, 1 * H:2 * H])
        g = jnp.tanh(z[:, 2 * H:3 * H])
        o = jax.nn.sigmoid(z[:, 3 * H:4 * H])
        c_new = f * c[l] + i * g
        h_new = o * jnp.tanh(c_new)
        h_out.append(h_new)
        c_out.append(c_new)
        x = h_new
    logits = x @ raw["w_dec"].T + raw["b_dec"]
    return logits, jnp.stack(h_out), jnp.stack(c_out)


def reference_decode(tokens_seq, h0, c0, raw):
    h, c = h0, c0
    logits_list = []
    for t in range(tokens_seq.shape[0]):
        logits, h, c = reference_step(tokens_seq[t], h, c, raw)
        logits_list.append(logits)
    return jnp.stack(logits_list), h, c


if __name__ == "__main__":
    # Shapes consistent with the module: vocab (input_size)=16, hidden_size=32,
    # output_size=16, batch=2, num_layers=2; decode test uses seq_len=8.
    vocab_size, hidden_size, output_size, batch = 16, 32, 16, 2
    seq_len = 8

    key = jax.random.PRNGKey(0)
    k_param, k_tok, k_seq = jax.random.split(key, 3)
    raw = init_raw_params(k_param, vocab_size, hidden_size, output_size)
    params = pack_params(raw)

    # hidden_state_initialization() equivalent (unidirectional LSTM):
    h0 = jnp.zeros((NUM_LAYERS, batch, hidden_size), jnp.float32)
    c0 = jnp.zeros((NUM_LAYERS, batch, hidden_size), jnp.float32)

    # --- single-step forward (matches CharModel.forward) ---
    tokens = jax.random.randint(k_tok, (batch,), 0, vocab_size, dtype=jnp.int32)
    logits, (h_n, c_n) = char_model_forward(tokens, (h0, c0), params)
    jax.block_until_ready((logits, h_n, c_n))

    ref_logits, ref_h, ref_c = reference_step(tokens, h0, c0, raw)
    assert jnp.allclose(logits, ref_logits, atol=1e-5), "logits mismatch"
    assert jnp.allclose(h_n, ref_h, atol=1e-5), "h_n mismatch"
    assert jnp.allclose(c_n, ref_c, atol=1e-5), "c_n mismatch"

    # --- fused multi-step decode: T timesteps in one pallas_call ---
    tokens_seq = jax.random.randint(k_seq, (seq_len, batch), 0, vocab_size,
                                    dtype=jnp.int32)
    logits_seq, (h_t, c_t) = char_model_decode(tokens_seq, (h0, c0), params)
    jax.block_until_ready((logits_seq, h_t, c_t))

    ref_logits_seq, ref_ht, ref_ct = reference_decode(tokens_seq, h0, c0, raw)
    assert jnp.allclose(logits_seq, ref_logits_seq, atol=1e-5), "seq logits mismatch"
    assert jnp.allclose(h_t, ref_ht, atol=1e-5), "seq h_n mismatch"
    assert jnp.allclose(c_t, ref_ct, atol=1e-5), "seq c_n mismatch"

    print("KERNEL_OK")
</pallas_src>

<mosaic_0001>
module attributes {stable_mosaic.version = 11 : i64} {
  func.func @charmodel_kernel(%arg0: i32, %arg1: memref<1x2xi32, #tpu.memory_space<smem>>, %arg2: memref<2x128xf32, #tpu.memory_space<vmem>>, %arg3: memref<16x128xf32, #tpu.memory_space<vmem>>, %arg4: memref<32x128xf32, #tpu.memory_space<vmem>>, %arg5: memref<1x64x128xf32, #tpu.memory_space<vmem>>, %arg6: memref<2x1x128xf32, #tpu.memory_space<vmem>>, %arg7: memref<32x16xf32, #tpu.memory_space<vmem>>, %arg8: memref<1x16xf32, #tpu.memory_space<vmem>>, %arg9: memref<2x16xf32, #tpu.memory_space<vmem>>, %arg10: memref<2x128xf32, #tpu.memory_space<vmem>>) attributes {dimension_semantics = [#tpu.dimension_semantics<arbitrary>], iteration_bounds = array<i64: 1>, scalar_prefetch = 1 : i64, scratch_operands = 0 : i64, tpu.core_type = #tpu.core_type<tc>, window_params = [{pipeline_mode = #tpu.pipeline_mode<synchronous>, transform_indices = @transform_0, window_bounds = array<i64: 2, 128>}, {pipeline_mode = #tpu.pipeline_mode<synchronous>, transform_indices = @transform_1, window_bounds = array<i64: 16, 128>}, {pipeline_mode = #tpu.pipeline_mode<synchronous>, transform_indices = @transform_2, window_bounds = array<i64: 32, 128>}, {pipeline_mode = #tpu.pipeline_mode<synchronous>, transform_indices = @transform_3, window_bounds = array<i64: 1, 64, 128>}, {pipeline_mode = #tpu.pipeline_mode<synchronous>, transform_indices = @transform_4, window_bounds = array<i64: 2, 1, 128>}, {pipeline_mode = #tpu.pipeline_mode<synchronous>, transform_indices = @transform_5, window_bounds = array<i64: 32, 16>}, {pipeline_mode = #tpu.pipeline_mode<synchronous>, transform_indices = @transform_6, window_bounds = array<i64: 1, 16>}, {pipeline_mode = #tpu.pipeline_mode<synchronous>, transform_indices = @transform_7, window_bounds = array<i64: 2, 16>}, {pipeline_mode = #tpu.pipeline_mode<synchronous>, transform_indices = @transform_8, window_bounds = array<i64: 2, 128>}]} {
    %c0 = arith.constant 0 : index
    %c0_0 = arith.constant 0 : index
    %0 = vector.load %arg2[%c0, %c0_0] : memref<2x128xf32, #tpu.memory_space<vmem>>, vector<2x128xf32>
    %1 = vector.extract_strided_slice %0 {offsets = [0, 0], sizes = [2, 32], strides = [1, 1]} : vector<2x128xf32> to vector<2x32xf32>
    %2 = vector.extract_strided_slice %0 {offsets = [0, 64], sizes = [2, 32], strides = [1, 1]} : vector<2x128xf32> to vector<2x32xf32>
    %3 = vector.extract_strided_slice %0 {offsets = [0, 32], sizes = [2, 32], strides = [1, 1]} : vector<2x128xf32> to vector<2x32xf32>
    %4 = vector.extract_strided_slice %0 {offsets = [0, 96], sizes = [2, 32], strides = [1, 1]} : vector<2x128xf32> to vector<2x32xf32>
    %c0_1 = arith.constant 0 : index
    %c0_2 = arith.constant 0 : index
    %5 = vector.load %arg4[%c0_1, %c0_2] : memref<32x128xf32, #tpu.memory_space<vmem>>, vector<32x128xf32>
    %c0_3 = arith.constant 0 : index
    %c0_4 = arith.constant 0 : index
    %c0_5 = arith.constant 0 : index
    %6 = vector.load %arg5[%c0_3, %c0_4, %c0_5] : memref<1x64x128xf32, #tpu.memory_space<vmem>>, vector<1x64x128xf32>
    %7 = vector.shape_cast %6 : vector<1x64x128xf32> to vector<64x128xf32>
    %c0_6 = arith.constant 0 : index
    %c0_7 = arith.constant 0 : index
    %c0_8 = arith.constant 0 : index
    %8 = vector.load %arg6[%c0_6, %c0_7, %c0_8] : memref<2x1x128xf32, #tpu.memory_space<vmem>>, vector<1x1x128xf32>
    %9 = vector.shape_cast %8 : vector<1x1x128xf32> to vector<1x128xf32>
    %c1 = arith.constant 1 : index
    %c0_9 = arith.constant 0 : index
    %c0_10 = arith.constant 0 : index
    %10 = vector.load %arg6[%c1, %c0_9, %c0_10] : memref<2x1x128xf32, #tpu.memory_space<vmem>>, vector<1x1x128xf32>
    %11 = vector.shape_cast %10 : vector<1x1x128xf32> to vector<1x128xf32>
    %c0_11 = arith.constant 0 : index
    %c0_12 = arith.constant 0 : index
    %12 = vector.load %arg7[%c0_11, %c0_12] : memref<32x16xf32, #tpu.memory_space<vmem>>, vector<32x16xf32>
    %c0_13 = arith.constant 0 : index
    %c0_14 = arith.constant 0 : index
    %13 = vector.load %arg8[%c0_13, %c0_14] : memref<1x16xf32, #tpu.memory_space<vmem>>, vector<1x16xf32>
    %c0_15 = arith.constant 0 : index
    %c0_16 = arith.constant 0 : index
    %14 = memref.load %arg1[%c0_15, %c0_16] : memref<1x2xi32, #tpu.memory_space<smem>>
    %15 = arith.index_cast %14 : i32 to index
    %c0_17 = arith.constant 0 : index
    %16 = vector.load %arg3[%15, %c0_17] : memref<16x128xf32, #tpu.memory_space<vmem>>, vector<1x128xf32>
    %c0_18 = arith.constant 0 : index
    %c1_19 = arith.constant 1 : index
    %17 = memref.load %arg1[%c0_18, %c1_19] : memref<1x2xi32, #tpu.memory_space<smem>>
    %18 = arith.index_cast %17 : i32 to index
    %c0_20 = arith.constant 0 : index
    %19 = vector.load %arg3[%18, %c0_20] : memref<16x128xf32, #tpu.memory_space<vmem>>, vector<1x128xf32>
    %20 = tpu.concatenate %16, %19 in 0 : vector<1x128xf32>, vector<1x128xf32> -> vector<2x128xf32>
    %cst = arith.constant dense<0.000000e+00> : vector<2x128xf32>
    %21 = tpu.matmul %1, %5, %cst {dimension_numbers = #tpu.dot_dimension_numbers<[1], [0], [0], [1], [0, 0, 1, 1], [], []>} : vector<2x32xf32>, vector<32x128xf32>, vector<2x128xf32> -> vector<2x128xf32>
    %22 = arith.addf %20, %21 : vector<2x128xf32>
    %23 = vector.broadcast %9 : vector<1x128xf32> to vector<2x128xf32>
    %24 = arith.addf %22, %23 : vector<2x128xf32>
    %25 = vector.extract_strided_slice %24 {offsets = [0, 0], sizes = [2, 32], strides = [1, 1]} : vector<2x128xf32> to vector<2x32xf32>
    %26 = arith.negf %25 : vector<2x32xf32>
    %27 = math.exp %26 : vector<2x32xf32>
    %cst_21 = arith.constant 1.000000e+00 : f32
    %28 = vector.broadcast %cst_21 : f32 to vector<2x32xf32>
    %29 = arith.addf %28, %27 : vector<2x32xf32>
    %30 = arith.divf %28, %29 : vector<2x32xf32>
    %31 = vector.extract_strided_slice %24 {offsets = [0, 32], sizes = [2, 32], strides = [1, 1]} : vector<2x128xf32> to vector<2x32xf32>
    %32 = arith.negf %31 : vector<2x32xf32>
    %33 = math.exp %32 : vector<2x32xf32>
    %cst_22 = arith.constant 1.000000e+00 : f32
    %34 = vector.broadcast %cst_22 : f32 to vector<2x32xf32>
    %35 = arith.addf %34, %33 : vector<2x32xf32>
    %36 = arith.divf %34, %35 : vector<2x32xf32>
    %37 = vector.extract_strided_slice %24 {offsets = [0, 64], sizes = [2, 32], strides = [1, 1]} : vector<2x128xf32> to vector<2x32xf32>
    %38 = math.tanh %37 : vector<2x32xf32>
    %39 = vector.extract_strided_slice %24 {offsets = [0, 96], sizes = [2, 32], strides = [1, 1]} : vector<2x128xf32> to vector<2x32xf32>
    %40 = arith.negf %39 : vector<2x32xf32>
    %41 = math.exp %40 : vector<2x32xf32>
    %cst_23 = arith.constant 1.000000e+00 : f32
    %42 = vector.broadcast %cst_23 : f32 to vector<2x32xf32>
    %43 = arith.addf %42, %41 : vector<2x32xf32>
    %44 = arith.divf %42, %43 : vector<2x32xf32>
    %45 = arith.mulf %36, %3 : vector<2x32xf32>
    %46 = arith.mulf %30, %38 : vector<2x32xf32>
    %47 = arith.addf %45, %46 : vector<2x32xf32>
    %48 = math.tanh %47 : vector<2x32xf32>
    %49 = arith.mulf %44, %48 : vector<2x32xf32>
    %50 = tpu.concatenate %49, %2 in 1 : vector<2x32xf32>, vector<2x32xf32> -> vector<2x64xf32>
    %cst_24 = arith.constant dense<0.000000e+00> : vector<2x128xf32>
    %51 = tpu.matmul %50, %7, %cst_24 {dimension_numbers = #tpu.dot_dimension_numbers<[1], [0], [0], [1], [0, 0, 1, 1], [], []>} : vector<2x64xf32>, vector<64x128xf32>, vector<2x128xf32> -> vector<2x128xf32>
    %52 = vector.broadcast %11 : vector<1x128xf32> to vector<2x128xf32>
    %53 = arith.addf %51, %52 : vector<2x128xf32>
    %54 = vector.extract_strided_slice %53 {offsets = [0, 0], sizes = [2, 32], strides = [1, 1]} : vector<2x128xf32> to vector<2x32xf32>
    %55 = arith.negf %54 : vector<2x32xf32>
    %56 = math.exp %55 : vector<2x32xf32>
    %cst_25 = arith.constant 1.000000e+00 : f32
    %57 = vector.broadcast %cst_25 : f32 to vector<2x32xf32>
    %58 = arith.addf %57, %56 : vector<2x32xf32>
    %59 = arith.divf %57, %58 : vector<2x32xf32>
    %60 = vector.extract_strided_slice %53 {offsets = [0, 32], sizes = [2, 32], strides = [1, 1]} : vector<2x128xf32> to vector<2x32xf32>
    %61 = arith.negf %60 : vector<2x32xf32>
    %62 = math.exp %61 : vector<2x32xf32>
    %cst_26 = arith.constant 1.000000e+00 : f32
    %63 = vector.broadcast %cst_26 : f32 to vector<2x32xf32>
    %64 = arith.addf %63, %62 : vector<2x32xf32>
    %65 = arith.divf %63, %64 : vector<2x32xf32>
    %66 = vector.extract_strided_slice %53 {offsets = [0, 64], sizes = [2, 32], strides = [1, 1]} : vector<2x128xf32> to vector<2x32xf32>
    %67 = math.tanh %66 : vector<2x32xf32>
    %68 = vector.extract_strided_slice %53 {offsets = [0, 96], sizes = [2, 32], strides = [1, 1]} : vector<2x128xf32> to vector<2x32xf32>
    %69 = arith.negf %68 : vector<2x32xf32>
    %70 = math.exp %69 : vector<2x32xf32>
    %cst_27 = arith.constant 1.000000e+00 : f32
    %71 = vector.broadcast %cst_27 : f32 to vector<2x32xf32>
    %72 = arith.addf %71, %70 : vector<2x32xf32>
    %73 = arith.divf %71, %72 : vector<2x32xf32>
    %74 = arith.mulf %65, %4 : vector<2x32xf32>
    %75 = arith.mulf %59, %67 : vector<2x32xf32>
    %76 = arith.addf %74, %75 : vector<2x32xf32>
    %77 = math.tanh %76 : vector<2x32xf32>
    %78 = arith.mulf %73, %77 : vector<2x32xf32>
    %cst_28 = arith.constant dense<0.000000e+00> : vector<2x16xf32>
    %79 = tpu.matmul %78, %12, %cst_28 {dimension_numbers = #tpu.dot_dimension_numbers<[1], [0], [0], [1], [0, 0, 1, 1], [], []>} : vector<2x32xf32>, vector<32x16xf32>, vector<2x16xf32> -> vector<2x16xf32>
    %80 = vector.broadcast %13 : vector<1x16xf32> to vector<2x16xf32>
    %81 = arith.addf %79, %80 : vector<2x16xf32>
    %c0_29 = arith.constant 0 : index
    %c0_30 = arith.constant 0 : index
    %82 = vector.load %arg9[%c0_29, %c0_30] : memref<2x16xf32, #tpu.memory_space<vmem>>, vector<2x16xf32>
    tpu.vector_store %arg9[%c0_29, %c0_30], %81 {strides = array<i32>} : memref<2x16xf32, #tpu.memory_space<vmem>>, vector<2x16xf32>,
    %83 = tpu.concatenate %49, %47, %78, %76 in 1 : vector<2x32xf32>, vector<2x32xf32>, vector<2x32xf32>, vector<2x32xf32> -> vector<2x128xf32>
    %c0_31 = arith.constant 0 : index
    %c0_32 = arith.constant 0 : index
    %84 = vector.load %arg10[%c0_31, %c0_32] : memref<2x128xf32, #tpu.memory_space<vmem>>, vector<2x128xf32>
    tpu.vector_store %arg10[%c0_31, %c0_32], %83 {strides = array<i32>} : memref<2x128xf32, #tpu.memory_space<vmem>>, vector<2x128xf32>,
    return
  }
  func.func @transform_0(%arg0: i32, %arg1: memref<1x2xi32, #tpu.memory_space<smem>>) -> (i32, i32) {
    %c0_i32 = arith.constant 0 : i32
    %c0_i32_0 = arith.constant 0 : i32
    %c0_i32_1 = arith.constant 0 : i32
    return %c0_i32, %c0_i32_0 : i32, i32
  }
  func.func @transform_1(%arg0: i32, %arg1: memref<1x2xi32, #tpu.memory_space<smem>>) -> (i32, i32) {
    %c0_i32 = arith.constant 0 : i32
    %c0_i32_0 = arith.constant 0 : i32
    %c0_i32_1 = arith.constant 0 : i32
    return %c0_i32, %c0_i32_0 : i32, i32
  }
  func.func @transform_2(%arg0: i32, %arg1: memref<1x2xi32, #tpu.memory_space<smem>>) -> (i32, i32) {
    %c0_i32 = arith.constant 0 : i32
    %c0_i32_0 = arith.constant 0 : i32
    %c0_i32_1 = arith.constant 0 : i32
    return %c0_i32, %c0_i32_0 : i32, i32
  }
  func.func @transform_3(%arg0: i32, %arg1: memref<1x2xi32, #tpu.memory_space<smem>>) -> (i32, i32, i32) {
    %c0_i32 = arith.constant 0 : i32
    %c0_i32_0 = arith.constant 0 : i32
    %c0_i32_1 = arith.constant 0 : i32
    %c0_i32_2 = arith.constant 0 : i32
    return %c0_i32, %c0_i32_0, %c0_i32_1 : i32, i32, i32
  }
  func.func @transform_4(%arg0: i32, %arg1: memref<1x2xi32, #tpu.memory_space<smem>>) -> (i32, i32, i32) {
    %c0_i32 = arith.constant 0 : i32
    %c0_i32_0 = arith.constant 0 : i32
    %c0_i32_1 = arith.constant 0 : i32
    %c0_i32_2 = arith.constant 0 : i32
    return %c0_i32, %c0_i32_0, %c0_i32_1 : i32, i32, i32
  }
  func.func @transform_5(%arg0: i32, %arg1: memref<1x2xi32, #tpu.memory_space<smem>>) -> (i32, i32) {
    %c0_i32 = arith.constant 0 : i32
    %c0_i32_0 = arith.constant 0 : i32
    %c0_i32_1 = arith.constant 0 : i32
    return %c0_i32, %c0_i32_0 : i32, i32
  }
  func.func @transform_6(%arg0: i32, %arg1: memref<1x2xi32, #tpu.memory_space<smem>>) -> (i32, i32) {
    %c0_i32 = arith.constant 0 : i32
    %c0_i32_0 = arith.constant 0 : i32
    %c0_i32_1 = arith.constant 0 : i32
    return %c0_i32, %c0_i32_0 : i32, i32
  }
  func.func @transform_7(%arg0: i32, %arg1: memref<1x2xi32, #tpu.memory_space<smem>>) -> (i32, i32) {
    %c0_i32 = arith.constant 0 : i32
    %c0_i32_0 = arith.constant 0 : i32
    %c0_i32_1 = arith.constant 0 : i32
    return %c0_i32, %c0_i32_0 : i32, i32
  }
  func.func @transform_8(%arg0: i32, %arg1: memref<1x2xi32, #tpu.memory_space<smem>>) -> (i32, i32) {
    %c0_i32 = arith.constant 0 : i32
    %c0_i32_0 = arith.constant 0 : i32
    %c0_i32_1 = arith.constant 0 : i32
    return %c0_i32, %c0_i32_0 : i32, i32
  }
}

</mosaic_0001>

<llo_original>
// kernel: tpu_custom_call.1
$region0: #{tpu_custom_call.1}
  #allocation0 [shape = 'u32[]', space=smem, size = 0x4, offset = 0x4, fixed_abs, tag = 'smem constant byte address 0x4 - core index']
  #allocation1 [shape = 'u32[144,128]{1,0:T(1,128)}', space=vmem, size = 0x12000, scoped, tag = 'internal scratch']
  #allocation2 [shape = 's32[1]{0}', space=sflag, size = 0x4, scoped, tag = 'scoped memory for tpu_custom_call.1']
  #allocation3 [shape = 'u8[512]{0}', space=smem, size = 0x200, scoped, tag = 'prefetched SMEM operand 0']
  %s0 = inlined_call_operand.vmem [shape: s32[1,2], index: 0, kind: input, shape index: {}]
  %s1 = inlined_call_operand.vmem [shape: f32[2,128], index: 1, kind: input, shape index: {}]
  %s2 = inlined_call_operand.vmem [shape: f32[16,128], index: 2, kind: input, shape index: {}]
  %s3 = inlined_call_operand.vmem [shape: f32[32,128], index: 3, kind: input, shape index: {}]
  %s4 = inlined_call_operand.hbm [shape: f32[1,64,128], index: 4, kind: input, shape index: {}]
  %s5 = inlined_call_operand.vmem [shape: f32[2,1,128], index: 5, kind: input, shape index: {}]
  %s6 = inlined_call_operand.vmem [shape: f32[32,16], index: 6, kind: input, shape index: {}]
  %s7 = inlined_call_operand.vmem [shape: f32[1,16], index: 7, kind: input, shape index: {}]
  %s8 = inlined_call_operand.hbm [shape: f32[2,16], index: 8, kind: output, shape index: {0}]
  %s9 = inlined_call_operand.hbm [shape: f32[2,128], index: 9, kind: output, shape index: {1}]
  %10 = xla_tuple %s8, %s9
  %s11 = sld [smem:[#allocation0]]
  $region50: #{tpu_custom_call.1} parent=0
    _
  %s13 = ssub.s32 1, %s11
  %s14 = scalar_select 0, %s13, %s11
  %s15 = sshll.u32 %s0, 4
  %s16 = int_to_ptr.vmem [resolvable:$true] %s15
  %18 = dma.vmem_to_smem %s16, 16, [#allocation3], [#allocation2]
  %19 = dma.done [#allocation2], 16
  %20 = sfence
  $region1: #{tpu_custom_call.1} parent=0
    #allocation4 [shape = 'u8[32768]{0}', space=vmem, size = 0x8000, scoped, tag = 'input window, operand 4, single buffered']
    #allocation5 [shape = 's32[1]{0}', space=sflag, size = 0x4, scoped, tag = 'scoped memory for tpu_custom_call.1']
    #allocation6 [shape = 's32[1]{0}', space=sflag, size = 0x4, scoped, tag = 'scoped memory for tpu_custom_call.1']
    #allocation7 [shape = 'u8[1024]{0}', space=vmem, size = 0x400, scoped, tag = 'output window, operand 0, single buffered']
    #allocation8 [shape = 'u8[1024]{0}', space=vmem, size = 0x400, scoped, tag = 'output window, operand 1, single buffered']
    #allocation9 [shape = 's32[1]{0}', space=sflag, size = 0x4, scoped, tag = 'scoped memory for tpu_custom_call.1']
    %21 = vsyncpa [#allocation5], 0
    %22 = vsyncpa [#allocation6], 0
    %23 = vsyncpa [#allocation9], 0
    // Predicated region
    $region2: #{tpu_custom_call.1} parent=1 // pred_check
      _
    $region3: #{tpu_custom_call.1} parent=1 // pred_check_branch
      %25 = sbr.rel (0) target = $region5
    $region4: #{tpu_custom_call.1} parent=1 // pred_region
      _
    $region5: #{tpu_custom_call.1} parent=1 // pred_fallthru
      _
    // Predicated region
    $region6: #{tpu_custom_call.1} parent=1 // pred_check
      _
    $region7: #{tpu_custom_call.1} parent=1 // pred_check_branch
      %27 = sbr.rel (0) target = $region9
    $region8: #{tpu_custom_call.1} parent=1 // pred_region
      _
    $region9: #{tpu_custom_call.1} parent=1 // pred_fallthru
      _
    // Predicated region
    $region10: #{tpu_custom_call.1} parent=1 // pred_check
      _
    $region11: #{tpu_custom_call.1} parent=1 // pred_check_branch
      %29 = sbr.rel (0) target = $region13
    $region12: #{tpu_custom_call.1} parent=1 // pred_region
      _
    $region13: #{tpu_custom_call.1} parent=1 // pred_fallthru
      _
    // Predicated region
    $region14: #{tpu_custom_call.1} parent=1 // pred_check
      _
    $region15: #{tpu_custom_call.1} parent=1 // pred_check_branch
      %31 = sbr.rel (0) target = $region17
    $region16: #{tpu_custom_call.1} parent=1 // pred_region
      %s33 = ssub.s32 1024, 1024
      %34 = vsyncadd [#allocation5], %s33
      %s35 = sshll.u32 [#allocation4], 4
      %s36 = int_to_ptr.vmem [resolvable:$true] %s35
      %41 = dma.hbm_to_vmem [thread:$0]  %s4, 1024, %s36, [#allocation5], 128, 128, 8
    $region17: #{tpu_custom_call.1} parent=1 // pred_fallthru
      _
    // Predicated region
    $region18: #{tpu_custom_call.1} parent=1 // pred_check
      _
    $region19: #{tpu_custom_call.1} parent=1 // pred_check_branch
      %43 = sbr.rel (0) target = $region21
    $region20: #{tpu_custom_call.1} parent=1 // pred_region
      _
    $region21: #{tpu_custom_call.1} parent=1 // pred_fallthru
      _
    // Predicated region
    $region22: #{tpu_custom_call.1} parent=1 // pred_check
      _
    $region23: #{tpu_custom_call.1} parent=1 // pred_check_branch
      %45 = sbr.rel (0) target = $region25
    $region24: #{tpu_custom_call.1} parent=1 // pred_region
      _
    $region25: #{tpu_custom_call.1} parent=1 // pred_fallthru
      _
    // Predicated region
    $region26: #{tpu_custom_call.1} parent=1 // pred_check
      _
    $region27: #{tpu_custom_call.1} parent=1 // pred_check_branch
      %47 = sbr.rel (0) target = $region29
    $region28: #{tpu_custom_call.1} parent=1 // pred_region
      _
    $region29: #{tpu_custom_call.1} parent=1 // pred_fallthru
      _
    // Predicated region
    $region30: #{tpu_custom_call.1} parent=1 // pred_check
      _
    $region31: #{tpu_custom_call.1} parent=1 // pred_check_branch
      %49 = sbr.rel (0) target = $region33
    $region32: #{tpu_custom_call.1} parent=1 // pred_region
      %50 = dma.done [#allocation5], 1024
    $region33: #{tpu_custom_call.1} parent=1 // pred_fallthru
      _
    %v51 = vld [vmem:[%s1] sm:$0x3]
    %v52 = vld [vmem:[%s3] sm:$0xff]
    %v53 = vld [vmem:[%s3 + $0x8] sm:$0xff]
    %v54 = vld [vmem:[%s3 + $0x10] sm:$0xff]
    %v55 = vld [vmem:[%s3 + $0x18] sm:$0xff]
    %v56 = vld [vmem:[#allocation4] sm:$0xff]
    %v57 = vld [vmem:[#allocation4 + $0x8] sm:$0xff]
    %v58 = vld [vmem:[#allocation4 + $0x10] sm:$0xff]
    %v59 = vld [vmem:[#allocation4 + $0x18] sm:$0xff]
    %v60 = vld [vmem:[#allocation4 + $0x20] sm:$0xff]
    %v61 = vld [vmem:[#allocation4 + $0x28] sm:$0xff]
    %v62 = vld [vmem:[#allocation4 + $0x30] sm:$0xff]
    %v63 = vld [vmem:[#allocation4 + $0x38] sm:$0xff]
    %v64 = vld [vmem:[%s5] sm:$0x1]
    %s65 = scalar_lea.vmem %s5, 1
    %v66 = vld [vmem:[%s65] sm:$0x1]
    %v67 = vld [vmem:[%s6] sm:$0xff]
    %v68 = vld [vmem:[%s6 + $0x8] sm:$0xff]
    %v69 = vld [vmem:[%s6 + $0x10] sm:$0xff]
    %v70 = vld [vmem:[%s6 + $0x18] sm:$0xff]
    %v71 = vld [vmem:[%s7] sm:$0x1]
    %s72 = sld [smem:[#allocation3]]
    %s73 = scalar_lea.vmem %s2, %s72
    %v74 = vld [vmem:[%s73] sm:$0x1]
    %s75 = sld [smem:[#allocation3 + $0x1]]
    %s76 = scalar_lea.vmem %s2, %s75
    %v77 = vld [vmem:[%s76] sm:$0x1]
    %v79 = vrot.slane %v77, 7
    %vm81 = vcmask 1040384
    %v82 = vsel %vm81, %v74, %v79
    %vm83 = vcmask 261120
    %v85 = vsel %vm83, %v51, 0
    %87 = vmatprep.subr.mxu0 0.0
    %88 = vmatpush1.msra.mxu0 %v52
    %89 = vmatprep.subr.mxu0 0.0
    %90 = vmatpush1.msra.mxu0 %v53
    %91 = vmatprep.subr.mxu0 0.0
    %92 = vmatpush1.msra.mxu0 %v54
    %93 = vmatprep.subr.mxu0 0.0
    %94 = vmatpush1.msra.mxu0 %v55
    %95 = vmatprep.subr.mxu0 0.0
    %96 = vmatpush1.msra.mxu0 0.0
    %97 = vmatprep.subr.mxu0 0.0
    %98 = vmatpush1.msra.mxu0 0.0
    %99 = vmatprep.subr.mxu0 0.0
    %100 = vmatpush1.msra.mxu0 0.0
    %101 = vmatprep.subr.mxu0 0.0
    %102 = vmatpush1.msra.mxu0 0.0
    %103 = vmatprep.subr.mxu0 0.0
    %104 = vmatpush1.msra.mxu0 0.0
    %105 = vmatprep.subr.mxu0 0.0
    %106 = vmatpush1.msra.mxu0 0.0
    %107 = vmatprep.subr.mxu0 0.0
    %108 = vmatpush1.msra.mxu0 0.0
    %109 = vmatprep.subr.mxu0 0.0
    %110 = vmatpush1.msra.mxu0 0.0
    %111 = vmatprep.subr.mxu0 0.0
    %112 = vmatpush1.msra.mxu0 0.0
    %113 = vmatprep.subr.mxu0 0.0
    %114 = vmatpush1.msra.mxu0 0.0
    %115 = vmatprep.subr.mxu0 0.0
    %116 = vmatpush1.msra.mxu0 0.0
    %117 = vmatprep.subr.mxu0 0.0
    %118 = vmatpush1.msra.mxu0 0.0
    %119 = vmatprep.subr.mxu0 0.0
    %120 = vmatpush1.msra.mxu0 0.0
    %121 = vmatprep.subr.mxu0 0.0
    %122 = vmatpush1.msra.mxu0 0.0
    %123 = vmatprep.subr.mxu0 0.0
    %124 = vmatpush1.msra.mxu0 0.0
    %125 = vmatprep.subr.mxu0 0.0
    %126 = vmatpush1.msra.mxu0 0.0
    %127 = vmatprep.subr.mxu0 0.0
    %128 = vmatpush1.msra.mxu0 0.0
    %129 = vmatprep.subr.mxu0 0.0
    %130 = vmatpush1.msra.mxu0 0.0
    %131 = vmatprep.subr.mxu0 0.0
    %132 = vmatpush1.msra.mxu0 0.0
    %133 = vmatprep.subr.mxu0 0.0
    %134 = vmatpush1.msra.mxu0 0.0
    %135 = vmatprep.subr.mxu0 0.0
    %136 = vmatpush1.msra.mxu0 0.0
    %137 = vmatprep.subr.mxu0 0.0
    %138 = vmatpush1.msra.mxu0 0.0
    %139 = vmatprep.subr.mxu0 0.0
    %140 = vmatpush1.msra.mxu0 0.0
    %141 = vmatprep.subr.mxu0 0.0
    %142 = vmatpush1.msra.mxu0 0.0
    %143 = vmatprep.subr.mxu0 0.0
    %144 = vmatpush1.msra.mxu0 0.0
    %145 = vmatprep.subr.mxu0 0.0
    %146 = vmatpush1.msra.mxu0 0.0
    %147 = vmatprep.subr.mxu0 0.0
    %148 = vmatpush1.msra.mxu0 0.0
    %149 = vmatprep.subr.mxu0 0.0
    %150 = vmatpush1.msra.mxu0 0.0
    %151 = vmatprep.mubr.f32.mxu0 0.0
    %152 = vmatmul.mubr.f32.gmra.mrb[0].mxu0 %v85
    %v153 = vpop.f32.mrb[0].mxu0
    %v154 = vadd.f32 0.0, %v153
    %v155 = vpop.f32.mrb[0].mxu0
    %156 = vdwg.mxu0
    %v157 = vadd.f32 %v82, %v154
    %v159 = vlaneseq
    %v160 = vshrl.u32 %v159, 7
    %v161 = vsub.s32 0, %v160
    %v162 = vrot.slane %v64, %v161
    %v164 = vadd.f32 %v157, %v162
    %v165 = vxor.u32 %v164, 2147483648
    %v166 = vmul.f32 %v165, 1.442695
    %v167 = vpow.pop %v166
    %v168 = vadd.f32 %v167, 1.0
    %v169 = vrcp.pop %v168
    %v170 = vmul.f32 1.0, %v169
    %v171 = vtanh.pop %v164
    %v172 = vmul.f32 %v170, %v51
    %174 = vrot.lane.b32.xlu0 %v171, 64
    %v175 = vpop.permute.xlu0 %174
    %v177 = vmul.f32 %v170, %v175
    %179 = vrot.lane.b32.xlu0 %v177, 32
    %v180 = vpop.permute.xlu0 %179
    %v182 = vadd.f32 %v172, %v180
    %v183 = vtanh.pop %v182
    %185 = vrot.lane.b32.xlu0 %v183, 64
    %v186 = vpop.permute.xlu0 %185
    %v188 = vmul.f32 %v170, %v186
    %190 = vrot.lane.b32.xlu0 %v188, 32
    %v191 = vpop.permute.xlu0 %190
    %193 = vrot.lane.b32.xlu0 %v51, 96
    %v194 = vpop.permute.xlu0 %193
    %v196 = vsel %vm83, %v191, %v194
    %v198 = vlaneseq
    %v199 = vshrl.u32 %v198, 7
    %v200 = vsub.s32 0, %v199
    %v201 = vrot.slane %v66, %v200
    %vm203 = vcmask 523264
    %v205 = vsel %vm203, %v196, 0
    %207 = vmatprep.subr.mxu0 0.0
    %208 = vmatpush1.msra.mxu0 %v56
    %209 = vmatprep.subr.mxu0 0.0
    %210 = vmatpush1.msra.mxu0 %v57
    %211 = vmatprep.subr.mxu0 0.0
    %212 = vmatpush1.msra.mxu0 %v58
    %213 = vmatprep.subr.mxu0 0.0
    %214 = vmatpush1.msra.mxu0 %v59
    %215 = vmatprep.subr.mxu0 0.0
    %216 = vmatpush1.msra.mxu0 %v60
    %217 = vmatprep.subr.mxu0 0.0
    %218 = vmatpush1.msra.mxu0 %v61
    %219 = vmatprep.subr.mxu0 0.0
    %220 = vmatpush1.msra.mxu0 %v62
    %221 = vmatprep.subr.mxu0 0.0
    %222 = vmatpush1.msra.mxu0 %v63
    %223 = vmatprep.subr.mxu0 0.0
    %224 = vmatpush1.msra.mxu0 0.0
    %225 = vmatprep.subr.mxu0 0.0
    %226 = vmatpush1.msra.mxu0 0.0
    %227 = vmatprep.subr.mxu0 0.0
    %228 = vmatpush1.msra.mxu0 0.0
    %229 = vmatprep.subr.mxu0 0.0
    %230 = vmatpush1.msra.mxu0 0.0
    %231 = vmatprep.subr.mxu0 0.0
    %232 = vmatpush1.msra.mxu0 0.0
    %233 = vmatprep.subr.mxu0 0.0
    %234 = vmatpush1.msra.mxu0 0.0
    %235 = vmatprep.subr.mxu0 0.0
    %236 = vmatpush1.msra.mxu0 0.0
    %237 = vmatprep.subr.mxu0 0.0
    %238 = vmatpush1.msra.mxu0 0.0
    %239 = vmatprep.subr.mxu0 0.0
    %240 = vmatpush1.msra.mxu0 0.0
    %241 = vmatprep.subr.mxu0 0.0
    %242 = vmatpush1.msra.mxu0 0.0
    %243 = vmatprep.subr.mxu0 0.0
    %244 = vmatpush1.msra.mxu0 0.0
    %245 = vmatprep.subr.mxu0 0.0
    %246 = vmatpush1.msra.mxu0 0.0
    %247 = vmatprep.subr.mxu0 0.0
    %248 = vmatpush1.msra.mxu0 0.0
    %249 = vmatprep.subr.mxu0 0.0
    %250 = vmatpush1.msra.mxu0 0.0
    %251 = vmatprep.subr.mxu0 0.0
    %252 = vmatpush1.msra.mxu0 0.0
    %253 = vmatprep.subr.mxu0 0.0
    %254 = vmatpush1.msra.mxu0 0.0
    %255 = vmatprep.subr.mxu0 0.0
    %256 = vmatpush1.msra.mxu0 0.0
    %257 = vmatprep.subr.mxu0 0.0
    %258 = vmatpush1.msra.mxu0 0.0
    %259 = vmatprep.subr.mxu0 0.0
    %260 = vmatpush1.msra.mxu0 0.0
    %261 = vmatprep.subr.mxu0 0.0
    %262 = vmatpush1.msra.mxu0 0.0
    %263 = vmatprep.subr.mxu0 0.0
    %264 = vmatpush1.msra.mxu0 0.0
    %265 = vmatprep.subr.mxu0 0.0
    %266 = vmatpush1.msra.mxu0 0.0
    %267 = vmatprep.subr.mxu0 0.0
    %268 = vmatpush1.msra.mxu0 0.0
    %269 = vmatprep.subr.mxu0 0.0
    %270 = vmatpush1.msra.mxu0 0.0
    %271 = vmatprep.mubr.f32.mxu0 0.0
    %272 = vmatmul.mubr.f32.gmra.mrb[0].mxu0 %v205
    %v273 = vpop.f32.mrb[0].mxu0
    %v274 = vadd.f32 %v201, %v273
    %v275 = vpop.f32.mrb[0].mxu0
    %276 = vdwg.mxu0
    %v277 = vxor.u32 %v274, 2147483648
    %v278 = vmul.f32 %v277, 1.442695
    %v279 = vpow.pop %v278
    %v280 = vadd.f32 %v279, 1.0
    %v281 = vrcp.pop %v280
    %v282 = vmul.f32 1.0, %v281
    %v283 = vtanh.pop %v274
    %284 = vrot.lane.b32.xlu0 %v51, 64
    %v285 = vpop.permute.xlu0 %284
    %v287 = vmul.f32 %v282, %v285
    %289 = vrot.lane.b32.xlu0 %v283, 64
    %v290 = vpop.permute.xlu0 %289
    %v292 = vmul.f32 %v282, %v290
    %294 = vrot.lane.b32.xlu0 %v292, 32
    %v295 = vpop.permute.xlu0 %294
    %v297 = vadd.f32 %v287, %v295
    %v298 = vtanh.pop %v297
    %300 = vrot.lane.b32.xlu0 %v298, 64
    %v301 = vpop.permute.xlu0 %300
    %v303 = vmul.f32 %v282, %v301
    %v305 = vlaneseq
    %v306 = vshrl.u32 %v305, 7
    %v307 = vsub.s32 0, %v306
    %v308 = vrot.slane %v71, %v307
    %311 = vrot.lane.b32.xlu0 %v303, 32
    %v312 = vpop.permute.xlu0 %311
    %v313 = vsel %vm83, %v312, 0
    %315 = vmatprep.subr.mxu0 0.0
    %316 = vmatpush1.msra.mxu0 %v67
    %317 = vmatprep.subr.mxu0 0.0
    %318 = vmatpush1.msra.mxu0 %v68
    %319 = vmatprep.subr.mxu0 0.0
    %320 = vmatpush1.msra.mxu0 %v69
    %321 = vmatprep.subr.mxu0 0.0
    %322 = vmatpush1.msra.mxu0 %v70
    %323 = vmatprep.subr.mxu0 0.0
    %324 = vmatpush1.msra.mxu0 0.0
    %325 = vmatprep.subr.mxu0 0.0
    %326 = vmatpush1.msra.mxu0 0.0
    %327 = vmatprep.subr.mxu0 0.0
    %328 = vmatpush1.msra.mxu0 0.0
    %329 = vmatprep.subr.mxu0 0.0
    %330 = vmatpush1.msra.mxu0 0.0
    %331 = vmatprep.subr.mxu0 0.0
    %332 = vmatpush1.msra.mxu0 0.0
    %333 = vmatprep.subr.mxu0 0.0
    %334 = vmatpush1.msra.mxu0 0.0
    %335 = vmatprep.subr.mxu0 0.0
    %336 = vmatpush1.msra.mxu0 0.0
    %337 = vmatprep.subr.mxu0 0.0
    %338 = vmatpush1.msra.mxu0 0.0
    %339 = vmatprep.subr.mxu0 0.0
    %340 = vmatpush1.msra.mxu0 0.0
    %341 = vmatprep.subr.mxu0 0.0
    %342 = vmatpush1.msra.mxu0 0.0
    %343 = vmatprep.subr.mxu0 0.0
    %344 = vmatpush1.msra.mxu0 0.0
    %345 = vmatprep.subr.mxu0 0.0
    %346 = vmatpush1.msra.mxu0 0.0
    %347 = vmatprep.subr.mxu0 0.0
    %348 = vmatpush1.msra.mxu0 0.0
    %349 = vmatprep.subr.mxu0 0.0
    %350 = vmatpush1.msra.mxu0 0.0
    %351 = vmatprep.subr.mxu0 0.0
    %352 = vmatpush1.msra.mxu0 0.0
    %353 = vmatprep.subr.mxu0 0.0
    %354 = vmatpush1.msra.mxu0 0.0
    %355 = vmatprep.subr.mxu0 0.0
    %356 = vmatpush1.msra.mxu0 0.0
    %357 = vmatprep.subr.mxu0 0.0
    %358 = vmatpush1.msra.mxu0 0.0
    %359 = vmatprep.subr.mxu0 0.0
    %360 = vmatpush1.msra.mxu0 0.0
    %361 = vmatprep.subr.mxu0 0.0
    %362 = vmatpush1.msra.mxu0 0.0
    %363 = vmatprep.subr.mxu0 0.0
    %364 = vmatpush1.msra.mxu0 0.0
    %365 = vmatprep.subr.mxu0 0.0
    %366 = vmatpush1.msra.mxu0 0.0
    %367 = vmatprep.subr.mxu0 0.0
    %368 = vmatpush1.msra.mxu0 0.0
    %369 = vmatprep.subr.mxu0 0.0
    %370 = vmatpush1.msra.mxu0 0.0
    %371 = vmatprep.subr.mxu0 0.0
    %372 = vmatpush1.msra.mxu0 0.0
    %373 = vmatprep.subr.mxu0 0.0
    %374 = vmatpush1.msra.mxu0 0.0
    %375 = vmatprep.subr.mxu0 0.0
    %376 = vmatpush1.msra.mxu0 0.0
    %377 = vmatprep.subr.mxu0 0.0
    %378 = vmatpush1.msra.mxu0 0.0
    %379 = vmatprep.mubr.f32.mxu0 0.0
    %380 = vmatmul.mubr.f32.gmra.mrb[0].mxu0 %v313
    %v381 = vpop.f32.mrb[0].mxu0
    %v382 = vadd.f32 %v308, %v381
    %v383 = vpop.f32.mrb[0].mxu0
    %384 = vdwg.mxu0
    %vm385 = vcmask 123904
    %386 = vst.msk [vmem:[#allocation7] sm:$0x3] %vm385, %v382
    %387 = vrot.lane.b32.xlu0 %v303, 96
    %v388 = vpop.permute.xlu0 %387
    %391 = vrot.lane.b32.xlu0 %v297, 64
    %v392 = vpop.permute.xlu0 %391
    %v394 = vsel %vm83, %v191, %v182
    %v395 = vsel %vm203, %v394, %v388
    %vm396 = vcmask 785408
    %v397 = vsel %vm396, %v395, %v392
    %398 = vst [vmem:[#allocation8] sm:$0x3] %v397
    // Predicated region
    $region34: #{tpu_custom_call.1} parent=1 // pred_check
      _
    $region35: #{tpu_custom_call.1} parent=1 // pred_check_branch
      %400 = sbr.rel (0) target = $region37
    $region36: #{tpu_custom_call.1} parent=1 // pred_region
      %s402 = ssub.s32 32, 32
      %403 = vsyncadd [#allocation6], %s402
      %s405 = sshll.u32 [#allocation7], 4
      %s406 = int_to_ptr.vmem [resolvable:$true] %s405
      %408 = dma.vmem_to_hbm [thread:$0]  %s406, 32, %s8, [#allocation6]
    $region37: #{tpu_custom_call.1} parent=1 // pred_fallthru
      _
    // Predicated region
    $region38: #{tpu_custom_call.1} parent=1 // pred_check
      _
    $region39: #{tpu_custom_call.1} parent=1 // pred_check_branch
      %410 = sbr.rel (0) target = $region41
    $region40: #{tpu_custom_call.1} parent=1 // pred_region
      %s412 = ssub.s32 32, 32
      %413 = vsyncadd [#allocation9], %s412
      %s415 = sshll.u32 [#allocation8], 4
      %s416 = int_to_ptr.vmem [resolvable:$true] %s415
      %418 = dma.vmem_to_hbm [thread:$0]  %s416, 32, %s9, [#allocation9]
    $region41: #{tpu_custom_call.1} parent=1 // pred_fallthru
      _
    // Predicated region
    $region42: #{tpu_custom_call.1} parent=1 // pred_check
      _
    $region43: #{tpu_custom_call.1} parent=1 // pred_check_branch
      %420 = sbr.rel (0) target = $region45
    $region44: #{tpu_custom_call.1} parent=1 // pred_region
      %421 = dma.done [#allocation6], 32
    $region45: #{tpu_custom_call.1} parent=1 // pred_fallthru
      _
    // Predicated region
    $region46: #{tpu_custom_call.1} parent=1 // pred_check
      _
    $region47: #{tpu_custom_call.1} parent=1 // pred_check_branch
      %423 = sbr.rel (0) target = $region49
    $region48: #{tpu_custom_call.1} parent=1 // pred_region
      %424 = dma.done [#allocation9], 32
    $region49: #{tpu_custom_call.1} parent=1 // pred_fallthru
      _
    %425 = vsyncpa [#allocation5], 1
    %426 = vsyncpa [#allocation6], 1
    %427 = vsyncpa [#allocation9], 1

</llo_original>
